<compile_context>
chip_gen: v7x
topology: tpu7x:2x2x1
jax: 0.10.0
libtpu: 0.0.40
codegen_flags: <defaults>
</compile_context>

<pallas_src>
import jax
import jax.numpy as jnp
from jax import lax
from jax.experimental import pallas as pl
from jax.experimental.pallas import tpu as pltpu


def _skip_linear_kernel(x_ref, w_ref, b_ref, o_ref):
    # x_ref: (TM, D)   w_ref: (D, D) torch layout (out, in)
    # b_ref: (1, D) f32   o_ref: (TM, D)
    x = x_ref[...]
    # x @ W^T without a host-side transpose: contract x dim 1 with W dim 1.
    y = lax.dot_general(
        x, w_ref[...],
        dimension_numbers=(((1,), (1,)), ((), ())),
        preferred_element_type=jnp.float32,
    )
    o_ref[...] = (x.astype(jnp.float32) + y + b_ref[...]).astype(o_ref.dtype)


def _pick_row_tile(M, D, itemsize, *, tm_target=1024, vmem_budget=12 << 20):
    """Largest row tile (multiple of 8, <= tm_target) whose double-buffered
    x/out tiles + resident weight fit the VMEM budget."""
    resident = D * D * itemsize + 4 * D            # weight + f32 bias
    per_row = 4 * D * itemsize                     # x + out, double-buffered
    tm = (vmem_budget - resident) // max(per_row, 1)
    tm = max(8, min(tm_target, tm))
    tm = (tm // 8) * 8
    return M if M <= tm else tm


def skip_connection_linear(x, weight, bias):
    """input + Linear(input).

    x:      (B, S, D)
    weight: (D, D) torch nn.Linear layout (out_features, in_features)
    bias:   (D,)
    """
    B, S, D = x.shape
    M = B * S
    itemsize = jnp.dtype(x.dtype).itemsize

    x2 = x.reshape(M, D)                           # free reshape (contiguous)
    b2 = bias.reshape(1, D).astype(jnp.float32)    # one-time cast outside grid

    TM = _pick_row_tile(M, D, itemsize)
    grid = (pl.cdiv(M, TM),)

    cost = pl.CostEstimate(
        flops=2 * M * D * D,
        transcendentals=0,
        bytes_accessed=(2 * M * D + D * D + D) * itemsize,
    )

    out2 = pl.pallas_call(
        _skip_linear_kernel,
        out_shape=jax.ShapeDtypeStruct((M, D), x.dtype),
        grid=grid,
        in_specs=[
            pl.BlockSpec((TM, D), lambda i: (i, 0)),   # x: tiled over rows
            pl.BlockSpec((D, D), lambda i: (0, 0)),    # W: VMEM-resident
            pl.BlockSpec((1, D), lambda i: (0, 0)),    # b: VMEM-resident
        ],
        out_specs=pl.BlockSpec((TM, D), lambda i: (i, 0)),
        compiler_params=pltpu.CompilerParams(
            dimension_semantics=("parallel",),         # megacore on v7x
        ),
        cost_estimate=cost,
    )(x2, weight, b2)

    return out2.reshape(B, S, D)


if __name__ == "__main__":
    # Small shapes implied by the module's usage in graph_encoder.py
    batch, seq, hidden = 2, 8, 32

    key = jax.random.PRNGKey(0)
    k_x, k_w, k_b = jax.random.split(key, 3)

    x = jax.random.normal(k_x, (batch, seq, hidden), dtype=jnp.float32)

    # Deterministic parameter init matching nn.Linear's default uniform bound.
    bound = 1.0 / (hidden ** 0.5)
    weight = jax.random.uniform(k_w, (hidden, hidden), jnp.float32, -bound, bound)
    bias = jax.random.uniform(k_b, (hidden,), jnp.float32, -bound, bound)

    out = skip_connection_linear(x, weight, bias)
    out = jax.block_until_ready(out)

    # Pure-JAX reference of the PyTorch forward: input + Linear(input)
    ref = x + (jnp.einsum("bsd,od->bso", x, weight) + bias)

    assert out.shape == (batch, seq, hidden)
    assert jnp.allclose(out, ref, atol=1e-5, rtol=1e-5), "mismatch vs reference"
    print("KERNEL_OK")
</pallas_src>

<mosaic_0001>
module attributes {stable_mosaic.version = 11 : i64} {
  func.func @_skip_linear_kernel(%arg0: i32, %arg1: memref<16x32xf32, #tpu.memory_space<vmem>>, %arg2: memref<32x32xf32, #tpu.memory_space<vmem>>, %arg3: memref<1x32xf32, #tpu.memory_space<vmem>>, %arg4: memref<16x32xf32, #tpu.memory_space<vmem>>) attributes {dimension_semantics = [#tpu.dimension_semantics<parallel>], iteration_bounds = array<i64: 1>, scalar_prefetch = 0 : i64, scratch_operands = 0 : i64, tpu.core_type = #tpu.core_type<tc>, window_params = [{transform_indices = @transform_0, window_bounds = array<i64: 16, 32>}, {pipeline_mode = #tpu.pipeline_mode<synchronous>, transform_indices = @transform_1, window_bounds = array<i64: 32, 32>}, {pipeline_mode = #tpu.pipeline_mode<synchronous>, transform_indices = @transform_2, window_bounds = array<i64: 1, 32>}, {transform_indices = @transform_3, window_bounds = array<i64: 16, 32>}]} {
    %c0 = arith.constant 0 : index
    %c0_0 = arith.constant 0 : index
    %0 = vector.load %arg1[%c0, %c0_0] : memref<16x32xf32, #tpu.memory_space<vmem>>, vector<16x32xf32>
    %c0_1 = arith.constant 0 : index
    %c0_2 = arith.constant 0 : index
    %1 = vector.load %arg2[%c0_1, %c0_2] : memref<32x32xf32, #tpu.memory_space<vmem>>, vector<32x32xf32>
    %cst = arith.constant dense<0.000000e+00> : vector<16x32xf32>
    %2 = tpu.matmul %0, %1, %cst {dimension_numbers = #tpu.dot_dimension_numbers<[1], [1], [0], [0], [0, 0, 1, 0], [], []>} : vector<16x32xf32>, vector<32x32xf32>, vector<16x32xf32> -> vector<16x32xf32>
    %3 = arith.addf %0, %2 : vector<16x32xf32>
    %c0_3 = arith.constant 0 : index
    %c0_4 = arith.constant 0 : index
    %4 = vector.load %arg3[%c0_3, %c0_4] : memref<1x32xf32, #tpu.memory_space<vmem>>, vector<1x32xf32>
    %5 = vector.broadcast %4 : vector<1x32xf32> to vector<16x32xf32>
    %6 = arith.addf %3, %5 : vector<16x32xf32>
    %c0_5 = arith.constant 0 : index
    %c0_6 = arith.constant 0 : index
    %7 = vector.load %arg4[%c0_5, %c0_6] : memref<16x32xf32, #tpu.memory_space<vmem>>, vector<16x32xf32>
    tpu.vector_store %arg4[%c0_5, %c0_6], %6 {strides = array<i32>} : memref<16x32xf32, #tpu.memory_space<vmem>>, vector<16x32xf32>,
    return
  }
  func.func @transform_0(%arg0: i32) -> (i32, i32) {
    %c0_i32 = arith.constant 0 : i32
    %c0_i32_0 = arith.constant 0 : i32
    return %arg0, %c0_i32 : i32, i32
  }
  func.func @transform_1(%arg0: i32) -> (i32, i32) {
    %c0_i32 = arith.constant 0 : i32
    %c0_i32_0 = arith.constant 0 : i32
    %c0_i32_1 = arith.constant 0 : i32
    return %c0_i32, %c0_i32_0 : i32, i32
  }
  func.func @transform_2(%arg0: i32) -> (i32, i32) {
    %c0_i32 = arith.constant 0 : i32
    %c0_i32_0 = arith.constant 0 : i32
    %c0_i32_1 = arith.constant 0 : i32
    return %c0_i32, %c0_i32_0 : i32, i32
  }
  func.func @transform_3(%arg0: i32) -> (i32, i32) {
    %c0_i32 = arith.constant 0 : i32
    %c0_i32_0 = arith.constant 0 : i32
    return %arg0, %c0_i32 : i32, i32
  }
}

</mosaic_0001>

<llo_original>
// kernel: tpu_custom_call.1
$region0: #{tpu_custom_call.1}
  #allocation0 [shape = 'u32[]', space=smem, size = 0x4, offset = 0x4, fixed_abs, tag = 'smem constant byte address 0x4 - core index']
  #allocation1 [shape = 'u32[144,128]{1,0:T(1,128)}', space=vmem, size = 0x12000, scoped, tag = 'internal scratch']
  %s0 = inlined_call_operand.hbm [shape: f32[16,32], index: 0, kind: input, shape index: {}]
  %s1 = inlined_call_operand.hbm [shape: f32[32,32], index: 1, kind: input, shape index: {}]
  %s2 = inlined_call_operand.vmem [shape: f32[1,32], index: 2, kind: input, shape index: {}]
  %s3 = inlined_call_operand.hbm [shape: f32[16,32], index: 3, kind: output, shape index: {}]
  %s4 = sld [smem:[#allocation0]]
  $region30: #{tpu_custom_call.1} parent=0
    _
  %s6 = ssub.s32 1, %s4
  %s7 = scalar_select 0, %s6, %s4
  $region1: #{tpu_custom_call.1} parent=0
    #allocation2 [shape = 'u8[8192]{0}', space=vmem, size = 0x2000, scoped, tag = 'input window, operand 0, single buffered']
    #allocation3 [shape = 's32[1]{0}', space=sflag, size = 0x4, scoped, tag = 'scoped memory for tpu_custom_call.1']
    #allocation4 [shape = 's32[1]{0}', space=sflag, size = 0x4, scoped, tag = 'scoped memory for tpu_custom_call.1']
    #allocation5 [shape = 'u8[16384]{0}', space=vmem, size = 0x4000, scoped, tag = 'input window, operand 1, single buffered']
    #allocation6 [shape = 's32[1]{0}', space=sflag, size = 0x4, scoped, tag = 'scoped memory for tpu_custom_call.1']
    #allocation7 [shape = 'u8[8192]{0}', space=vmem, size = 0x2000, scoped, tag = 'output window, operand 0, single buffered']
    %8 = vsyncpa [#allocation3], 0
    %9 = vsyncpa [#allocation6], 0
    %10 = vsyncpa [#allocation4], 0
    // Predicated region
    $region2: #{tpu_custom_call.1} parent=1 // pred_check
      _
    $region3: #{tpu_custom_call.1} parent=1 // pred_check_branch
      %12 = sbr.rel (0) target = $region5
    $region4: #{tpu_custom_call.1} parent=1 // pred_region
      %s14 = ssub.s32 256, 256
      %15 = vsyncadd [#allocation3], %s14
      %s16 = sshll.u32 [#allocation2], 4
      %s17 = int_to_ptr.vmem [resolvable:$true] %s16
      %22 = dma.hbm_to_vmem [thread:$0]  %s0, 256, %s17, [#allocation3], 128, 128, 8
    $region5: #{tpu_custom_call.1} parent=1 // pred_fallthru
      _
    // Predicated region
    $region6: #{tpu_custom_call.1} parent=1 // pred_check
      _
    $region7: #{tpu_custom_call.1} parent=1 // pred_check_branch
      %24 = sbr.rel (0) target = $region9
    $region8: #{tpu_custom_call.1} parent=1 // pred_region
      %s26 = ssub.s32 512, 512
      %27 = vsyncadd [#allocation6], %s26
      %s28 = sshll.u32 [#allocation5], 4
      %s29 = int_to_ptr.vmem [resolvable:$true] %s28
      %34 = dma.hbm_to_vmem [thread:$0]  %s1, 512, %s29, [#allocation6], 128, 128, 8
    $region9: #{tpu_custom_call.1} parent=1 // pred_fallthru
      _
    // Predicated region
    $region10: #{tpu_custom_call.1} parent=1 // pred_check
      _
    $region11: #{tpu_custom_call.1} parent=1 // pred_check_branch
      %36 = sbr.rel (0) target = $region13
    $region12: #{tpu_custom_call.1} parent=1 // pred_region
      _
    $region13: #{tpu_custom_call.1} parent=1 // pred_fallthru
      _
    // Predicated region
    $region14: #{tpu_custom_call.1} parent=1 // pred_check
      _
    $region15: #{tpu_custom_call.1} parent=1 // pred_check_branch
      %38 = sbr.rel (0) target = $region17
    $region16: #{tpu_custom_call.1} parent=1 // pred_region
      %39 = dma.done [#allocation3], 256
    $region17: #{tpu_custom_call.1} parent=1 // pred_fallthru
      _
    // Predicated region
    $region18: #{tpu_custom_call.1} parent=1 // pred_check
      _
    $region19: #{tpu_custom_call.1} parent=1 // pred_check_branch
      %41 = sbr.rel (0) target = $region21
    $region20: #{tpu_custom_call.1} parent=1 // pred_region
      %42 = dma.done [#allocation6], 512
    $region21: #{tpu_custom_call.1} parent=1 // pred_fallthru
      _
    %v43 = vld [vmem:[#allocation2] sm:$0xff]
    %v44 = vld [vmem:[#allocation2 + $0x8] sm:$0xff]
    %v45 = vld [vmem:[#allocation5] sm:$0xff]
    %v46 = vld [vmem:[#allocation5 + $0x8] sm:$0xff]
    %v47 = vld [vmem:[#allocation5 + $0x10] sm:$0xff]
    %v48 = vld [vmem:[#allocation5 + $0x18] sm:$0xff]
    %vm49 = vcmask 261120
    %v51 = vsel %vm49, %v43, 0
    %v54 = vsel %vm49, %v44, 0
    %v57 = vsel %vm49, %v45, 0
    %v60 = vsel %vm49, %v46, 0
    %v63 = vsel %vm49, %v47, 0
    %v66 = vsel %vm49, %v48, 0
    %68 = vmatprep.subr.mxu0 0.0
    %69 = vmatpush1.xpose.msra.mxu0 %v57
    %70 = vmatprep.subr.mxu0 0.0
    %71 = vmatpush1.xpose.msra.mxu0 %v60
    %72 = vmatprep.subr.mxu0 0.0
    %73 = vmatpush1.xpose.msra.mxu0 %v63
    %74 = vmatprep.subr.mxu0 0.0
    %75 = vmatpush1.xpose.msra.mxu0 %v66
    %76 = vmatprep.subr.mxu0 0.0
    %77 = vmatpush1.xpose.msra.mxu0 0.0
    %78 = vmatprep.subr.mxu0 0.0
    %79 = vmatpush1.xpose.msra.mxu0 0.0
    %80 = vmatprep.subr.mxu0 0.0
    %81 = vmatpush1.xpose.msra.mxu0 0.0
    %82 = vmatprep.subr.mxu0 0.0
    %83 = vmatpush1.xpose.msra.mxu0 0.0
    %84 = vmatprep.subr.mxu0 0.0
    %85 = vmatpush1.xpose.msra.mxu0 0.0
    %86 = vmatprep.subr.mxu0 0.0
    %87 = vmatpush1.xpose.msra.mxu0 0.0
    %88 = vmatprep.subr.mxu0 0.0
    %89 = vmatpush1.xpose.msra.mxu0 0.0
    %90 = vmatprep.subr.mxu0 0.0
    %91 = vmatpush1.xpose.msra.mxu0 0.0
    %92 = vmatprep.subr.mxu0 0.0
    %93 = vmatpush1.xpose.msra.mxu0 0.0
    %94 = vmatprep.subr.mxu0 0.0
    %95 = vmatpush1.xpose.msra.mxu0 0.0
    %96 = vmatprep.subr.mxu0 0.0
    %97 = vmatpush1.xpose.msra.mxu0 0.0
    %98 = vmatprep.subr.mxu0 0.0
    %99 = vmatpush1.xpose.msra.mxu0 0.0
    %100 = vmatprep.subr.mxu0 0.0
    %101 = vmatpush1.xpose.msra.mxu0 0.0
    %102 = vmatprep.subr.mxu0 0.0
    %103 = vmatpush1.xpose.msra.mxu0 0.0
    %104 = vmatprep.subr.mxu0 0.0
    %105 = vmatpush1.xpose.msra.mxu0 0.0
    %106 = vmatprep.subr.mxu0 0.0
    %107 = vmatpush1.xpose.msra.mxu0 0.0
    %108 = vmatprep.subr.mxu0 0.0
    %109 = vmatpush1.xpose.msra.mxu0 0.0
    %110 = vmatprep.subr.mxu0 0.0
    %111 = vmatpush1.xpose.msra.mxu0 0.0
    %112 = vmatprep.subr.mxu0 0.0
    %113 = vmatpush1.xpose.msra.mxu0 0.0
    %114 = vmatprep.subr.mxu0 0.0
    %115 = vmatpush1.xpose.msra.mxu0 0.0
    %116 = vmatprep.subr.mxu0 0.0
    %117 = vmatpush1.xpose.msra.mxu0 0.0
    %118 = vmatprep.subr.mxu0 0.0
    %119 = vmatpush1.xpose.msra.mxu0 0.0
    %120 = vmatprep.subr.mxu0 0.0
    %121 = vmatpush1.xpose.msra.mxu0 0.0
    %122 = vmatprep.subr.mxu0 0.0
    %123 = vmatpush1.xpose.msra.mxu0 0.0
    %124 = vmatprep.subr.mxu0 0.0
    %125 = vmatpush1.xpose.msra.mxu0 0.0
    %126 = vmatprep.subr.mxu0 0.0
    %127 = vmatpush1.xpose.msra.mxu0 0.0
    %128 = vmatprep.subr.mxu0 0.0
    %129 = vmatpush1.xpose.msra.mxu0 0.0
    %130 = vmatprep.subr.mxu0 0.0
    %131 = vmatpush1.xpose.msra.mxu0 0.0
    %132 = vmatprep.mubr.f32.mxu0 0.0
    %133 = vmatmul.mubr.f32.gmra.mrb[0].mxu0 %v51
    %v134 = vpop.f32.mrb[0].mxu0
    %v135 = vadd.f32 0.0, %v134
    %v136 = vpop.f32.mrb[0].mxu0
    %137 = vmatprep.mubr.f32.mxu0 0.0
    %138 = vmatmul.mubr.f32.gmra.mrb[0].mxu0 %v54
    %v139 = vpop.f32.mrb[0].mxu0
    %v140 = vadd.f32 0.0, %v139
    %v141 = vpop.f32.mrb[0].mxu0
    %142 = vdwg.mxu0
    %v143 = vadd.f32 %v43, %v135
    %v144 = vadd.f32 %v44, %v140
    %v145 = vld [vmem:[%s2] sm:$0x1]
    %v147 = vlaneseq
    %v148 = vshrl.u32 %v147, 7
    %v149 = vsub.s32 0, %v148
    %v150 = vrot.slane %v145, %v149
    %v152 = vadd.f32 %v143, %v150
    %v153 = vadd.f32 %v144, %v150
    %154 = vst.msk [vmem:[#allocation7] sm:$0xff] %vm49, %v152
    %155 = vst.msk [vmem:[#allocation7 + $0x8] sm:$0xff] %vm49, %v153
    // Predicated region
    $region22: #{tpu_custom_call.1} parent=1 // pred_check
      _
    $region23: #{tpu_custom_call.1} parent=1 // pred_check_branch
      %157 = sbr.rel (0) target = $region25
    $region24: #{tpu_custom_call.1} parent=1 // pred_region
      %s159 = ssub.s32 256, 256
      %160 = vsyncadd [#allocation4], %s159
      %s161 = sshll.u32 [#allocation7], 4
      %s162 = int_to_ptr.vmem [resolvable:$true] %s161
      %167 = dma.vmem_to_hbm [thread:$0]  %s162, 256, %s3, [#allocation4], 128, 128, 8
    $region25: #{tpu_custom_call.1} parent=1 // pred_fallthru
      _
    // Predicated region
    $region26: #{tpu_custom_call.1} parent=1 // pred_check
      _
    $region27: #{tpu_custom_call.1} parent=1 // pred_check_branch
      %169 = sbr.rel (0) target = $region29
    $region28: #{tpu_custom_call.1} parent=1 // pred_region
      %170 = dma.done [#allocation4], 256
    $region29: #{tpu_custom_call.1} parent=1 // pred_fallthru
      _
    %171 = vsyncpa [#allocation3], 1
    %172 = vsyncpa [#allocation6], 1
    %173 = vsyncpa [#allocation4], 1

</llo_original>
